<compile_context>
chip_gen: v6e
topology: v6e:2x2x1
jax: 0.10.0
libtpu: 0.0.40
codegen_flags: <defaults>
</compile_context>

<pallas_src>
import functools

import numpy as np
import jax
import jax.numpy as jnp
from jax import lax
from jax.experimental import pallas as pl
from jax.experimental.pallas import tpu as pltpu

_EPS = 1e-6  # nn.PairwiseDistance default eps (added elementwise before the norm)


def _aas_kernel(aux_ref, colp_ref, q_ref, post_ref, stats_ref, *, num_classes):
    """Both modality posteriors for one query tile (class-on-sublane layout).

    aux_ref   : (2C+2, Dcat) resident  [P_rgb | 0 ; 0 | P_flow ; mask_rgb ; mask_flow]
    colp_ref  : (2C, 1)      resident  hoisted ||p||^2 - 2*eps*sum(p) + D*eps^2
    q_ref     : (TQ, Dcat)   concatenated query tile [q_rgb | q_flow]
    post_ref  : (2C, TQ)     rows 0..C-1 rgb posterior, rows C..2C-1 flow posterior
    stats_ref : (4, TQ)      rows [c_r, h_r, c_f, h_f]
    """
    C = num_classes
    aux = aux_ref[...].astype(jnp.float32)        # (2C+2, Dcat)
    q = q_ref[...].astype(jnp.float32)            # (TQ, Dcat)
    colp = colp_ref[...]                          # (2C, 1) f32

    protos = aux[:2 * C, :]                       # block-diag prototypes (2C, Dcat)
    qmask = aux[2 * C:, :]                        # per-modality feature masks (2, Dcat)

    # One MXU push gives both modalities' cross terms: (2C, TQ)
    cross = lax.dot_general(protos, q, (((1,), (1,)), ((), ())),
                            preferred_element_type=jnp.float32)
    # Per-query ||q||^2 + 2*eps*sum(q), one lane-dense row per modality: (2, TQ)
    rowq = lax.dot_general(qmask, q * q + (2.0 * _EPS) * q,
                           (((1,), (1,)), ((), ())),
                           preferred_element_type=jnp.float32)

    def one_modality(cross_m, rowq_m, colp_m):
        # ||q - p + eps||^2 expanded: colp (per class) + rowq (per query) - 2*p.q
        # TODO(synk): the expanded form can lose precision for near-identical
        # query/prototype pairs vs. PyTorch's elementwise-subtract-then-norm.
        dist = jnp.sqrt(jnp.maximum(colp_m + rowq_m - 2.0 * cross_m, 0.0))   # (C, TQ)
        # Min-shifted softmax over the class (sublane) axis: denom >= 1.
        dmin = jnp.min(dist, axis=0, keepdims=True)
        shifted = dist - dmin                                                # >= 0
        unnorm = jnp.exp(-shifted)                                           # <= 1
        denom = jnp.sum(unnorm, axis=0, keepdims=True)
        inv = pl.reciprocal(denom, approx=True)                              # EUP slot
        post = unnorm * inv
        conf = jnp.max(post, axis=0, keepdims=True)
        # log(post_k) = -(d_k - dmin) - log(denom)
        #   => H = sum_k p_k*(d_k - dmin) + log(denom)  (no 0*log(0) hazard)
        ent = jnp.sum(post * shifted, axis=0, keepdims=True) + jnp.log(denom)
        return post, conf, ent

    post_r, c_r, h_r = one_modality(cross[:C], rowq[0:1], colp[:C])
    post_f, c_f, h_f = one_modality(cross[C:], rowq[1:2], colp[C:])

    post_ref[...] = jnp.concatenate([post_r, post_f], axis=0)        # (2C, TQ)
    stats_ref[...] = jnp.concatenate([c_r, h_r, c_f, h_f], axis=0)   # (4, TQ)


def _choose_query_tile(Q, Dcat, C, in_itemsize):
    """Pick the query tile: big (amortize ~0.35us/step, long DMA bursts) but
    >=2 balanced grid steps for Q > 128 so v7x's two TCs both get work."""
    if Q <= 128:
        return Q  # single tile; block dims equal the full array dims
    dcat_pad = ((Dcat + 127) // 128) * 128
    # Double-buffered per-query VMEM bytes: query tile + posterior tile + stats tile.
    per_q = 2 * (dcat_pad * in_itemsize + (2 * C) * 4 + 8 * 4)
    vmem = 64 << 20  # v7x physical per-TC VMEM; conservative fallback
    try:
        info = pltpu.get_tpu_info()
        vmem = int(getattr(info, "vmem_capacity_bytes", vmem) or vmem)
    except Exception:
        pass
    # Stay well inside the default scoped VMEM on every generation (16/32 MiB).
    budget = min(vmem // 4, 12 << 20)
    cap = budget // per_q
    tq = min(4096, max(128, (cap // 128) * 128))
    # At least two (roughly balanced) grid steps -> both v7x TensorCores used.
    half = (pl.cdiv(Q, 2) // 128) * 128
    return max(128, min(tq, max(128, half)))


def aas_posteriors(ctx_rgb, tgt_rgb, ctx_flow, tgt_flow, *, tq=None):
    """Fused Pallas kernel: both modality posteriors, confidences, entropies.

    Returns class-major posteriors (C, Q) plus (Q,) stats; callers needing the
    PyTorch-facing (Q, C) layout transpose afterwards (see aas_forward).
    """
    ctx_rgb = jnp.asarray(ctx_rgb)
    ctx_flow = jnp.asarray(ctx_flow)
    tgt_rgb = jnp.asarray(tgt_rgb)
    tgt_flow = jnp.asarray(tgt_flow)

    C, Dr = ctx_rgb.shape
    Cf, Df = ctx_flow.shape
    Q, Dqr = tgt_rgb.shape
    Qf, Dqf = tgt_flow.shape
    assert C == Cf and Q == Qf and Dr == Dqr and Df == Dqf
    Dcat = Dr + Df

    # Keep narrow dtypes (e.g. bf16) on the wire; the kernel upcasts to f32.
    in_dtype = jnp.result_type(tgt_rgb.dtype, tgt_flow.dtype)
    in_itemsize = jnp.dtype(in_dtype).itemsize

    # One concatenated query read instead of two sub-128-lane padded reads.
    q_cat = jnp.concatenate([tgt_rgb.astype(in_dtype),
                             tgt_flow.astype(in_dtype)], axis=1)       # (Q, Dcat)

    # Resident fused matrix: block-diag prototypes + per-modality feature masks.
    zeros_rf = jnp.zeros((C, Df), in_dtype)
    zeros_fr = jnp.zeros((C, Dr), in_dtype)
    mask_r = jnp.concatenate([jnp.ones((1, Dr), in_dtype),
                              jnp.zeros((1, Df), in_dtype)], axis=1)
    mask_f = jnp.concatenate([jnp.zeros((1, Dr), in_dtype),
                              jnp.ones((1, Df), in_dtype)], axis=1)
    aux = jnp.concatenate([
        jnp.concatenate([ctx_rgb.astype(in_dtype), zeros_rf], axis=1),
        jnp.concatenate([zeros_fr, ctx_flow.astype(in_dtype)], axis=1),
        mask_r, mask_f], axis=0)                                       # (2C+2, Dcat)

    # Hoisted prototype norm term (f32), computed once in the wrapper.
    pr_r = ctx_rgb.astype(jnp.float32)
    pr_f = ctx_flow.astype(jnp.float32)
    colp_r = (jnp.sum(pr_r * pr_r - (2.0 * _EPS) * pr_r, axis=1, keepdims=True)
              + Dr * _EPS * _EPS)
    colp_f = (jnp.sum(pr_f * pr_f - (2.0 * _EPS) * pr_f, axis=1, keepdims=True)
              + Df * _EPS * _EPS)
    colp = jnp.concatenate([colp_r, colp_f], axis=0)                   # (2C, 1) f32

    if tq is None:
        tq = _choose_query_tile(Q, Dcat, C, in_itemsize)
    grid = (pl.cdiv(Q, tq),)

    flops = int(2 * Q * (2 * C + 2) * Dcat + 12 * Q * 2 * C)
    transcendentals = int(Q * (2 * 2 * C + 4))          # sqrt+exp per elem; log+recip per row
    bytes_accessed = int(Q * Dcat * in_itemsize + 4 * Q * (2 * C + 4)
                         + (2 * C + 2) * Dcat * in_itemsize + 2 * C * 4)

    post, stats = pl.pallas_call(
        functools.partial(_aas_kernel, num_classes=C),
        out_shape=(
            jax.ShapeDtypeStruct((2 * C, Q), jnp.float32),   # [post_r ; post_f]
            jax.ShapeDtypeStruct((4, Q), jnp.float32),       # [c_r, h_r, c_f, h_f]
        ),
        grid=grid,
        in_specs=[
            pl.BlockSpec((2 * C + 2, Dcat), lambda i: (0, 0)),   # fused protos/masks, resident
            pl.BlockSpec((2 * C, 1), lambda i: (0, 0)),          # hoisted col_p, resident
            pl.BlockSpec((tq, Dcat), lambda i: (i, 0)),          # concatenated query tile
        ],
        out_specs=(
            pl.BlockSpec((2 * C, tq), lambda i: (0, i)),         # lane-dense posterior tile
            pl.BlockSpec((4, tq), lambda i: (0, i)),             # packed stats tile
        ),
        compiler_params=pltpu.CompilerParams(
            dimension_semantics=("parallel",)),
        cost_estimate=pl.CostEstimate(
            flops=flops, transcendentals=transcendentals,
            bytes_accessed=bytes_accessed),
    )(aux, colp, q_cat)

    post_r_cm = post[:C]       # (C, Q) class-major
    post_f_cm = post[C:]
    c_r, h_r, c_f, h_f = stats[0], stats[1], stats[2], stats[3]
    return post_r_cm, c_r, h_r, post_f_cm, c_f, h_f


def aas_forward(x):
    """Pallas-backed equivalent of AAS.forward."""
    tgt_rgb = x['target_rgb_features']
    tgt_flow = x['target_flow_features']

    p_r_cm, c_r, h_r, p_f_cm, c_f, h_f = aas_posteriors(
        x['context_rgb_features'], tgt_rgb,
        x['context_flow_features'], tgt_flow)

    # PyTorch-facing (Q, C) layout; consumers that can take class-major (C, Q)
    # should call aas_posteriors directly and skip this extra pass.
    p_r = p_r_cm.T
    p_f = p_f_cm.T

    # Device-side decision; only the (Q,)-byte boolean mask crosses to host.
    mask_np = np.asarray(jax.device_get((h_r > h_f) & (c_r > c_f)))

    # TODO(synk): the Q_r/Q_f Python-list grouping is inherently host-side; it
    # is built from the caller-provided arrays (free if they are host-resident).
    tgt_rgb_np = np.asarray(tgt_rgb)
    tgt_flow_np = np.asarray(tgt_flow)
    Q_r, Q_f = [], []
    for i in range(mask_np.shape[0]):
        pair = (tgt_rgb_np[i], tgt_flow_np[i])
        (Q_r if bool(mask_np[i]) else Q_f).append(pair)

    return {'Q_r': Q_r, 'Q_f': Q_f,
            'p_r': p_r, 'c_r': c_r, 'h_r': h_r,
            'p_f': p_f, 'c_f': c_f, 'h_f': h_f}


def _reference_posterior(protos, queries):
    """Pure-numpy reference matching the PyTorch module."""
    protos = np.asarray(protos, np.float64)
    queries = np.asarray(queries, np.float64)
    Qn, Cn = queries.shape[0], protos.shape[0]
    post = np.zeros((Qn, Cn), np.float64)
    for i in range(Qn):
        for k in range(Cn):
            d = np.sqrt(np.sum((queries[i] - protos[k] + _EPS) ** 2))
            post[i, k] = np.exp(-d)
    post = post / post.sum(axis=1, keepdims=True)
    c = post.max(axis=1)
    h = -np.sum(post * np.log(post), axis=1)
    return post, c, h


if __name__ == "__main__":
    key = jax.random.PRNGKey(0)
    k1, k2, k3, k4 = jax.random.split(key, 4)

    num_classes, num_queries = 4, 8
    d_rgb, d_flow = 32, 64
    x = {
        'context_rgb_features': jax.random.normal(k1, (num_classes, d_rgb), jnp.float32),
        'context_flow_features': jax.random.normal(k2, (num_classes, d_flow), jnp.float32),
        'target_rgb_features': jax.random.normal(k3, (num_queries, d_rgb), jnp.float32),
        'target_flow_features': jax.random.normal(k4, (num_queries, d_flow), jnp.float32),
    }

    out = aas_forward(x)
    jax.block_until_ready((out['p_r'], out['c_r'], out['h_r'],
                           out['p_f'], out['c_f'], out['h_f']))

    # Check against the numpy reference (tolerances loose for the EUP approx recip).
    for (ctx_key, tgt_key, pk, ck, hk) in (
            ('context_rgb_features', 'target_rgb_features', 'p_r', 'c_r', 'h_r'),
            ('context_flow_features', 'target_flow_features', 'p_f', 'c_f', 'h_f')):
        p_ref, c_ref, h_ref = _reference_posterior(x[ctx_key], x[tgt_key])
        np.testing.assert_allclose(np.asarray(out[pk]), p_ref, rtol=2e-3, atol=1e-3)
        np.testing.assert_allclose(np.asarray(out[ck]), c_ref, rtol=2e-3, atol=1e-3)
        np.testing.assert_allclose(np.asarray(out[hk]), h_ref, rtol=2e-3, atol=1e-3)

    # Also exercise the multi-step tiled path (tq=128, 3 grid steps, partial tail).
    q_big = 300
    kb1, kb2 = jax.random.split(jax.random.PRNGKey(1), 2)
    tgt_rgb_big = jax.random.normal(kb1, (q_big, d_rgb), jnp.float32)
    tgt_flow_big = jax.random.normal(kb2, (q_big, d_flow), jnp.float32)
    p_r_cm, c_r_b, h_r_b, p_f_cm, c_f_b, h_f_b = aas_posteriors(
        x['context_rgb_features'], tgt_rgb_big,
        x['context_flow_features'], tgt_flow_big)
    jax.block_until_ready((p_r_cm, c_r_b, h_r_b, p_f_cm, c_f_b, h_f_b))
    for (protos, queries, p_cm, c_b, h_b) in (
            (x['context_rgb_features'], tgt_rgb_big, p_r_cm, c_r_b, h_r_b),
            (x['context_flow_features'], tgt_flow_big, p_f_cm, c_f_b, h_f_b)):
        p_ref, c_ref, h_ref = _reference_posterior(protos, queries)
        np.testing.assert_allclose(np.asarray(p_cm).T, p_ref, rtol=2e-3, atol=1e-3)
        np.testing.assert_allclose(np.asarray(c_b), c_ref, rtol=2e-3, atol=1e-3)
        np.testing.assert_allclose(np.asarray(h_b), h_ref, rtol=2e-3, atol=1e-3)

    print("KERNEL_OK")
</pallas_src>

<mosaic_0001>
module attributes {stable_mosaic.version = 11 : i64} {
  func.func @_aas_kernel(%arg0: i32, %arg1: memref<10x96xf32, #tpu.memory_space<vmem>>, %arg2: memref<8x1xf32, #tpu.memory_space<vmem>>, %arg3: memref<8x96xf32, #tpu.memory_space<vmem>>, %arg4: memref<8x8xf32, #tpu.memory_space<vmem>>, %arg5: memref<4x8xf32, #tpu.memory_space<vmem>>) attributes {dimension_semantics = [#tpu.dimension_semantics<parallel>], iteration_bounds = array<i64: 1>, scalar_prefetch = 0 : i64, scratch_operands = 0 : i64, tpu.core_type = #tpu.core_type<tc>, window_params = [{pipeline_mode = #tpu.pipeline_mode<synchronous>, transform_indices = @transform_0, window_bounds = array<i64: 10, 96>}, {pipeline_mode = #tpu.pipeline_mode<synchronous>, transform_indices = @transform_1, window_bounds = array<i64: 8, 1>}, {transform_indices = @transform_2, window_bounds = array<i64: 8, 96>}, {transform_indices = @transform_3, window_bounds = array<i64: 8, 8>}, {transform_indices = @transform_4, window_bounds = array<i64: 4, 8>}]} {
    %c0 = arith.constant 0 : index
    %c0_0 = arith.constant 0 : index
    %0 = vector.load %arg1[%c0, %c0_0] : memref<10x96xf32, #tpu.memory_space<vmem>>, vector<10x96xf32>
    %c0_1 = arith.constant 0 : index
    %c0_2 = arith.constant 0 : index
    %1 = vector.load %arg3[%c0_1, %c0_2] : memref<8x96xf32, #tpu.memory_space<vmem>>, vector<8x96xf32>
    %c0_3 = arith.constant 0 : index
    %c0_4 = arith.constant 0 : index
    %2 = vector.load %arg2[%c0_3, %c0_4] : memref<8x1xf32, #tpu.memory_space<vmem>>, vector<8x1xf32>
    %3 = vector.extract_strided_slice %0 {offsets = [0, 0], sizes = [8, 96], strides = [1, 1]} : vector<10x96xf32> to vector<8x96xf32>
    %4 = vector.extract_strided_slice %0 {offsets = [8, 0], sizes = [2, 96], strides = [1, 1]} : vector<10x96xf32> to vector<2x96xf32>
    %cst = arith.constant dense<0.000000e+00> : vector<8x8xf32>
    %5 = tpu.matmul %3, %1, %cst {dimension_numbers = #tpu.dot_dimension_numbers<[1], [1], [0], [0], [0, 0, 1, 0], [], []>} : vector<8x96xf32>, vector<8x96xf32>, vector<8x8xf32> -> vector<8x8xf32>
    %6 = arith.mulf %1, %1 : vector<8x96xf32>
    %cst_5 = arith.constant 2.000000e-06 : f32
    %7 = vector.broadcast %cst_5 : f32 to vector<8x96xf32>
    %8 = arith.mulf %7, %1 : vector<8x96xf32>
    %9 = arith.addf %6, %8 : vector<8x96xf32>
    %cst_6 = arith.constant dense<0.000000e+00> : vector<2x8xf32>
    %10 = tpu.matmul %4, %9, %cst_6 {dimension_numbers = #tpu.dot_dimension_numbers<[1], [1], [0], [0], [0, 0, 1, 0], [], []>} : vector<2x96xf32>, vector<8x96xf32>, vector<2x8xf32> -> vector<2x8xf32>
    %11 = vector.extract_strided_slice %5 {offsets = [0, 0], sizes = [4, 8], strides = [1, 1]} : vector<8x8xf32> to vector<4x8xf32>
    %12 = vector.extract_strided_slice %10 {offsets = [0, 0], sizes = [1, 8], strides = [1, 1]} : vector<2x8xf32> to vector<1x8xf32>
    %13 = vector.extract_strided_slice %2 {offsets = [0, 0], sizes = [4, 1], strides = [1, 1]} : vector<8x1xf32> to vector<4x1xf32>
    %14 = vector.broadcast %13 : vector<4x1xf32> to vector<4x8xf32>
    %15 = vector.broadcast %12 : vector<1x8xf32> to vector<4x8xf32>
    %16 = arith.addf %14, %15 : vector<4x8xf32>
    %cst_7 = arith.constant 2.000000e+00 : f32
    %17 = vector.broadcast %cst_7 : f32 to vector<4x8xf32>
    %18 = arith.mulf %17, %11 : vector<4x8xf32>
    %19 = arith.subf %16, %18 : vector<4x8xf32>
    %cst_8 = arith.constant 0.000000e+00 : f32
    %20 = vector.broadcast %cst_8 : f32 to vector<4x8xf32>
    %21 = arith.maximumf %19, %20 : vector<4x8xf32>
    %22 = math.sqrt %21 : vector<4x8xf32>
    %cst_9 = arith.constant dense<0x7F800000> : vector<8xf32>
    %23 = vector.multi_reduction <minimumf>, %22, %cst_9 [0] : vector<4x8xf32> to vector<8xf32>
    %24 = vector.shape_cast %23 : vector<8xf32> to vector<1x8xf32>
    %25 = vector.broadcast %24 : vector<1x8xf32> to vector<4x8xf32>
    %26 = arith.subf %22, %25 : vector<4x8xf32>
    %cst_10 = arith.constant 0.000000e+00 : f32
    %27 = vector.broadcast %cst_10 : f32 to vector<4x8xf32>
    %28 = arith.subf %27, %26 : vector<4x8xf32>
    %29 = math.exp %28 : vector<4x8xf32>
    %cst_11 = arith.constant dense<0.000000e+00> : vector<8xf32>
    %30 = vector.multi_reduction <add>, %29, %cst_11 [0] : vector<4x8xf32> to vector<8xf32>
    %31 = vector.shape_cast %30 : vector<8xf32> to vector<1x8xf32>
    %32 = tpu.reciprocal %31 {approx = true} : vector<1x8xf32> -> vector<1x8xf32>
    %33 = vector.broadcast %32 : vector<1x8xf32> to vector<4x8xf32>
    %34 = arith.mulf %29, %33 : vector<4x8xf32>
    %cst_12 = arith.constant dense<0xFF800000> : vector<8xf32>
    %35 = vector.multi_reduction <maximumf>, %34, %cst_12 [0] : vector<4x8xf32> to vector<8xf32>
    %36 = vector.shape_cast %35 : vector<8xf32> to vector<1x8xf32>
    %37 = arith.mulf %34, %26 : vector<4x8xf32>
    %cst_13 = arith.constant dense<0.000000e+00> : vector<8xf32>
    %38 = vector.multi_reduction <add>, %37, %cst_13 [0] : vector<4x8xf32> to vector<8xf32>
    %39 = vector.shape_cast %38 : vector<8xf32> to vector<1x8xf32>
    %40 = math.log %31 : vector<1x8xf32>
    %41 = arith.addf %39, %40 : vector<1x8xf32>
    %42 = vector.extract_strided_slice %5 {offsets = [4, 0], sizes = [4, 8], strides = [1, 1]} : vector<8x8xf32> to vector<4x8xf32>
    %43 = vector.extract_strided_slice %10 {offsets = [1, 0], sizes = [1, 8], strides = [1, 1]} : vector<2x8xf32> to vector<1x8xf32>
    %44 = vector.extract_strided_slice %2 {offsets = [4, 0], sizes = [4, 1], strides = [1, 1]} : vector<8x1xf32> to vector<4x1xf32>
    %45 = vector.broadcast %44 : vector<4x1xf32> to vector<4x8xf32>
    %46 = vector.broadcast %43 : vector<1x8xf32> to vector<4x8xf32>
    %47 = arith.addf %45, %46 : vector<4x8xf32>
    %cst_14 = arith.constant 2.000000e+00 : f32
    %48 = vector.broadcast %cst_14 : f32 to vector<4x8xf32>
    %49 = arith.mulf %48, %42 : vector<4x8xf32>
    %50 = arith.subf %47, %49 : vector<4x8xf32>
    %cst_15 = arith.constant 0.000000e+00 : f32
    %51 = vector.broadcast %cst_15 : f32 to vector<4x8xf32>
    %52 = arith.maximumf %50, %51 : vector<4x8xf32>
    %53 = math.sqrt %52 : vector<4x8xf32>
    %cst_16 = arith.constant dense<0x7F800000> : vector<8xf32>
    %54 = vector.multi_reduction <minimumf>, %53, %cst_16 [0] : vector<4x8xf32> to vector<8xf32>
    %55 = vector.shape_cast %54 : vector<8xf32> to vector<1x8xf32>
    %56 = vector.broadcast %55 : vector<1x8xf32> to vector<4x8xf32>
    %57 = arith.subf %53, %56 : vector<4x8xf32>
    %cst_17 = arith.constant 0.000000e+00 : f32
    %58 = vector.broadcast %cst_17 : f32 to vector<4x8xf32>
    %59 = arith.subf %58, %57 : vector<4x8xf32>
    %60 = math.exp %59 : vector<4x8xf32>
    %cst_18 = arith.constant dense<0.000000e+00> : vector<8xf32>
    %61 = vector.multi_reduction <add>, %60, %cst_18 [0] : vector<4x8xf32> to vector<8xf32>
    %62 = vector.shape_cast %61 : vector<8xf32> to vector<1x8xf32>
    %63 = tpu.reciprocal %62 {approx = true} : vector<1x8xf32> -> vector<1x8xf32>
    %64 = vector.broadcast %63 : vector<1x8xf32> to vector<4x8xf32>
    %65 = arith.mulf %60, %64 : vector<4x8xf32>
    %cst_19 = arith.constant dense<0xFF800000> : vector<8xf32>
    %66 = vector.multi_reduction <maximumf>, %65, %cst_19 [0] : vector<4x8xf32> to vector<8xf32>
    %67 = vector.shape_cast %66 : vector<8xf32> to vector<1x8xf32>
    %68 = arith.mulf %65, %57 : vector<4x8xf32>
    %cst_20 = arith.constant dense<0.000000e+00> : vector<8xf32>
    %69 = vector.multi_reduction <add>, %68, %cst_20 [0] : vector<4x8xf32> to vector<8xf32>
    %70 = vector.shape_cast %69 : vector<8xf32> to vector<1x8xf32>
    %71 = math.log %62 : vector<1x8xf32>
    %72 = arith.addf %70, %71 : vector<1x8xf32>
    %73 = tpu.concatenate %34, %65 in 0 : vector<4x8xf32>, vector<4x8xf32> -> vector<8x8xf32>
    %c0_21 = arith.constant 0 : index
    %c0_22 = arith.constant 0 : index
    %74 = vector.load %arg4[%c0_21, %c0_22] : memref<8x8xf32, #tpu.memory_space<vmem>>, vector<8x8xf32>
    tpu.vector_store %arg4[%c0_21, %c0_22], %73 {strides = array<i32>} : memref<8x8xf32, #tpu.memory_space<vmem>>, vector<8x8xf32>,
    %75 = tpu.concatenate %36, %41, %67, %72 in 0 : vector<1x8xf32>, vector<1x8xf32>, vector<1x8xf32>, vector<1x8xf32> -> vector<4x8xf32>
    %c0_23 = arith.constant 0 : index
    %c0_24 = arith.constant 0 : index
    %76 = vector.load %arg5[%c0_23, %c0_24] : memref<4x8xf32, #tpu.memory_space<vmem>>, vector<4x8xf32>
    tpu.vector_store %arg5[%c0_23, %c0_24], %75 {strides = array<i32>} : memref<4x8xf32, #tpu.memory_space<vmem>>, vector<4x8xf32>,
    return
  }
  func.func @transform_0(%arg0: i32) -> (i32, i32) {
    %c0_i32 = arith.constant 0 : i32
    %c0_i32_0 = arith.constant 0 : i32
    %c0_i32_1 = arith.constant 0 : i32
    return %c0_i32, %c0_i32_0 : i32, i32
  }
  func.func @transform_1(%arg0: i32) -> (i32, i32) {
    %c0_i32 = arith.constant 0 : i32
    %c0_i32_0 = arith.constant 0 : i32
    %c0_i32_1 = arith.constant 0 : i32
    return %c0_i32, %c0_i32_0 : i32, i32
  }
  func.func @transform_2(%arg0: i32) -> (i32, i32) {
    %c0_i32 = arith.constant 0 : i32
    %c0_i32_0 = arith.constant 0 : i32
    return %arg0, %c0_i32 : i32, i32
  }
  func.func @transform_3(%arg0: i32) -> (i32, i32) {
    %c0_i32 = arith.constant 0 : i32
    %c0_i32_0 = arith.constant 0 : i32
    return %c0_i32, %arg0 : i32, i32
  }
  func.func @transform_4(%arg0: i32) -> (i32, i32) {
    %c0_i32 = arith.constant 0 : i32
    %c0_i32_0 = arith.constant 0 : i32
    return %c0_i32, %arg0 : i32, i32
  }
}

</mosaic_0001>

<llo_original>
// kernel: tpu_custom_call.1
$region0: #{tpu_custom_call.1}
  #allocation0 [shape = 'u32[]', space=smem, size = 0x4, offset = 0x4, fixed_abs, tag = 'smem constant byte address 0x4 - core index']
  #allocation1 [shape = 'u32[144,128]{1,0:T(1,128)}', space=vmem, size = 0x12000, scoped, tag = 'internal scratch']
  %s0 = inlined_call_operand.hbm [shape: f32[10,96], index: 0, kind: input, shape index: {}]
  %s1 = inlined_call_operand.vmem [shape: f32[8,1], index: 1, kind: input, shape index: {}]
  %s2 = inlined_call_operand.vmem [shape: f32[8,96], index: 2, kind: input, shape index: {}]
  %s3 = inlined_call_operand.hbm [shape: f32[8,8], index: 3, kind: output, shape index: {0}]
  %s4 = inlined_call_operand.hbm [shape: f32[4,8], index: 4, kind: output, shape index: {1}]
  %5 = xla_tuple %s3, %s4
  %s6 = sld [smem:[#allocation0]]
  $region34: #{tpu_custom_call.1} parent=0
    _
  %s8 = ssub.s32 1, %s6
  %s9 = scalar_select 0, %s8, %s6
  $region1: #{tpu_custom_call.1} parent=0
    #allocation2 [shape = 'u8[8192]{0}', space=vmem, size = 0x2000, scoped, tag = 'input window, operand 0, single buffered']
    #allocation3 [shape = 's32[1]{0}', space=sflag, size = 0x4, scoped, tag = 'scoped memory for tpu_custom_call.1']
    #allocation4 [shape = 's32[1]{0}', space=sflag, size = 0x4, scoped, tag = 'scoped memory for tpu_custom_call.1']
    #allocation5 [shape = 'u8[4096]{0}', space=vmem, size = 0x1000, scoped, tag = 'output window, operand 0, single buffered']
    #allocation6 [shape = 'u8[2048]{0}', space=vmem, size = 0x800, scoped, tag = 'output window, operand 1, single buffered']
    #allocation7 [shape = 's32[1]{0}', space=sflag, size = 0x4, scoped, tag = 'scoped memory for tpu_custom_call.1']
    %10 = vsyncpa [#allocation3], 0
    %11 = vsyncpa [#allocation4], 0
    %12 = vsyncpa [#allocation7], 0
    // Predicated region
    $region2: #{tpu_custom_call.1} parent=1 // pred_check
      _
    $region3: #{tpu_custom_call.1} parent=1 // pred_check_branch
      %14 = sbr.rel (0) target = $region5
    $region4: #{tpu_custom_call.1} parent=1 // pred_region
      %s16 = ssub.s32 256, 256
      %17 = vsyncadd [#allocation3], %s16
      %s18 = sshll.u32 [#allocation2], 4
      %s19 = int_to_ptr.vmem [resolvable:$true] %s18
      %24 = dma.hbm_to_vmem [thread:$0]  %s0, 256, %s19, [#allocation3], 128, 128, 8
    $region5: #{tpu_custom_call.1} parent=1 // pred_fallthru
      _
    // Predicated region
    $region6: #{tpu_custom_call.1} parent=1 // pred_check
      _
    $region7: #{tpu_custom_call.1} parent=1 // pred_check_branch
      %26 = sbr.rel (0) target = $region9
    $region8: #{tpu_custom_call.1} parent=1 // pred_region
      _
    $region9: #{tpu_custom_call.1} parent=1 // pred_fallthru
      _
    // Predicated region
    $region10: #{tpu_custom_call.1} parent=1 // pred_check
      _
    $region11: #{tpu_custom_call.1} parent=1 // pred_check_branch
      %28 = sbr.rel (0) target = $region13
    $region12: #{tpu_custom_call.1} parent=1 // pred_region
      _
    $region13: #{tpu_custom_call.1} parent=1 // pred_fallthru
      _
    // Predicated region
    $region14: #{tpu_custom_call.1} parent=1 // pred_check
      _
    $region15: #{tpu_custom_call.1} parent=1 // pred_check_branch
      %30 = sbr.rel (0) target = $region17
    $region16: #{tpu_custom_call.1} parent=1 // pred_region
      %31 = dma.done [#allocation3], 256
    $region17: #{tpu_custom_call.1} parent=1 // pred_fallthru
      _
    %v32 = vld [vmem:[#allocation2] sm:$0xff]
    %v33 = vld [vmem:[#allocation2 + $0x8] sm:$0x3]
    %v34 = vld [vmem:[%s2] sm:$0xff]
    %v35 = vld [vmem:[%s1] sm:$0xff]
    %vm36 = vcmask 785408
    %v38 = vsel %vm36, %v32, 0
    %v41 = vsel %vm36, %v34, 0
    %43 = vmatprep.subr.mxu0 0.0
    %44 = vmatpush1.xpose.msra.mxu0 0.0
    %45 = vmatprep.subr.mxu0 0.0
    %46 = vmatpush1.xpose.msra.mxu0 0.0
    %47 = vmatprep.subr.mxu0 0.0
    %48 = vmatpush1.xpose.msra.mxu0 0.0
    %49 = vmatprep.subr.mxu0 0.0
    %50 = vmatpush1.xpose.msra.mxu0 0.0
    %51 = vmatprep.subr.mxu0 0.0
    %52 = vmatpush1.xpose.msra.mxu0 0.0
    %53 = vmatprep.subr.mxu0 0.0
    %54 = vmatpush1.xpose.msra.mxu0 0.0
    %55 = vmatprep.subr.mxu0 0.0
    %56 = vmatpush1.xpose.msra.mxu0 0.0
    %57 = vmatprep.subr.mxu0 0.0
    %58 = vmatpush1.xpose.msra.mxu0 0.0
    %59 = vmatprep.subr.mxu0 0.0
    %60 = vmatpush1.xpose.msra.mxu0 0.0
    %61 = vmatprep.subr.mxu0 0.0
    %62 = vmatpush1.xpose.msra.mxu0 0.0
    %63 = vmatprep.subr.mxu0 0.0
    %64 = vmatpush1.xpose.msra.mxu0 0.0
    %65 = vmatprep.subr.mxu0 0.0
    %66 = vmatpush1.xpose.msra.mxu0 0.0
    %67 = vmatprep.subr.mxu0 0.0
    %68 = vmatpush1.xpose.msra.mxu0 0.0
    %69 = vmatprep.subr.mxu0 0.0
    %70 = vmatpush1.xpose.msra.mxu0 0.0
    %71 = vmatprep.subr.mxu0 0.0
    %72 = vmatpush1.xpose.msra.mxu0 0.0
    %73 = vmatprep.subr.mxu0 0.0
    %74 = vmatpush1.xpose.msra.mxu0 %v41
    %75 = vmatprep.subr.mxu0 0.0
    %76 = vmatpush2.xpose.msra.mxu0 0.0
    %77 = vmatprep.subr.mxu0 0.0
    %78 = vmatpush2.xpose.msra.mxu0 0.0
    %79 = vmatprep.subr.mxu0 0.0
    %80 = vmatpush2.xpose.msra.mxu0 0.0
    %81 = vmatprep.subr.mxu0 0.0
    %82 = vmatpush2.xpose.msra.mxu0 0.0
    %83 = vmatprep.subr.mxu0 0.0
    %84 = vmatpush2.xpose.msra.mxu0 0.0
    %85 = vmatprep.subr.mxu0 0.0
    %86 = vmatpush2.xpose.msra.mxu0 0.0
    %87 = vmatprep.subr.mxu0 0.0
    %88 = vmatpush2.xpose.msra.mxu0 0.0
    %89 = vmatprep.subr.mxu0 0.0
    %90 = vmatpush2.xpose.msra.mxu0 0.0
    %91 = vmatprep.subr.mxu0 0.0
    %92 = vmatpush2.xpose.msra.mxu0 0.0
    %93 = vmatprep.subr.mxu0 0.0
    %94 = vmatpush2.xpose.msra.mxu0 0.0
    %95 = vmatprep.subr.mxu0 0.0
    %96 = vmatpush2.xpose.msra.mxu0 0.0
    %97 = vmatprep.subr.mxu0 0.0
    %98 = vmatpush2.xpose.msra.mxu0 0.0
    %99 = vmatprep.subr.mxu0 0.0
    %100 = vmatpush2.xpose.msra.mxu0 0.0
    %101 = vmatprep.subr.mxu0 0.0
    %102 = vmatpush2.xpose.msra.mxu0 0.0
    %103 = vmatprep.subr.mxu0 0.0
    %104 = vmatpush2.xpose.msra.mxu0 0.0
    %105 = vmatprep.subr.mxu0 0.0
    %106 = vmatpush2.xpose.msra.mxu0 0.0
    %107 = vmatprep.mubr.f32.mxu0 0.0
    %108 = vmatmul.mubr.f32.gmra.mxu0 %v38
    %v109 = vpop.f32.mrf.mxu0
    %v110 = vadd.f32 0.0, %v109
    %v111 = vpop.f32.mrf.mxu0
    %112 = vdwg.mxu0
    %v113 = vmul.f32 %v34, %v34
    %v114 = vmul.f32 %v34, 2e-06
    %v115 = vadd.f32 %v113, %v114
    %v117 = vsel %vm36, %v33, 0
    %v120 = vsel %vm36, %v115, 0
    %122 = vmatprep.subr.mxu0 0.0
    %123 = vmatpush1.xpose.msra.mxu0 0.0
    %124 = vmatprep.subr.mxu0 0.0
    %125 = vmatpush1.xpose.msra.mxu0 0.0
    %126 = vmatprep.subr.mxu0 0.0
    %127 = vmatpush1.xpose.msra.mxu0 0.0
    %128 = vmatprep.subr.mxu0 0.0
    %129 = vmatpush1.xpose.msra.mxu0 0.0
    %130 = vmatprep.subr.mxu0 0.0
    %131 = vmatpush1.xpose.msra.mxu0 0.0
    %132 = vmatprep.subr.mxu0 0.0
    %133 = vmatpush1.xpose.msra.mxu0 0.0
    %134 = vmatprep.subr.mxu0 0.0
    %135 = vmatpush1.xpose.msra.mxu0 0.0
    %136 = vmatprep.subr.mxu0 0.0
    %137 = vmatpush1.xpose.msra.mxu0 0.0
    %138 = vmatprep.subr.mxu0 0.0
    %139 = vmatpush1.xpose.msra.mxu0 0.0
    %140 = vmatprep.subr.mxu0 0.0
    %141 = vmatpush1.xpose.msra.mxu0 0.0
    %142 = vmatprep.subr.mxu0 0.0
    %143 = vmatpush1.xpose.msra.mxu0 0.0
    %144 = vmatprep.subr.mxu0 0.0
    %145 = vmatpush1.xpose.msra.mxu0 0.0
    %146 = vmatprep.subr.mxu0 0.0
    %147 = vmatpush1.xpose.msra.mxu0 0.0
    %148 = vmatprep.subr.mxu0 0.0
    %149 = vmatpush1.xpose.msra.mxu0 0.0
    %150 = vmatprep.subr.mxu0 0.0
    %151 = vmatpush1.xpose.msra.mxu0 0.0
    %152 = vmatprep.subr.mxu0 0.0
    %153 = vmatpush1.xpose.msra.mxu0 %v120
    %154 = vmatprep.subr.mxu0 0.0
    %155 = vmatpush2.xpose.msra.mxu0 0.0
    %156 = vmatprep.subr.mxu0 0.0
    %157 = vmatpush2.xpose.msra.mxu0 0.0
    %158 = vmatprep.subr.mxu0 0.0
    %159 = vmatpush2.xpose.msra.mxu0 0.0
    %160 = vmatprep.subr.mxu0 0.0
    %161 = vmatpush2.xpose.msra.mxu0 0.0
    %162 = vmatprep.subr.mxu0 0.0
    %163 = vmatpush2.xpose.msra.mxu0 0.0
    %164 = vmatprep.subr.mxu0 0.0
    %165 = vmatpush2.xpose.msra.mxu0 0.0
    %166 = vmatprep.subr.mxu0 0.0
    %167 = vmatpush2.xpose.msra.mxu0 0.0
    %168 = vmatprep.subr.mxu0 0.0
    %169 = vmatpush2.xpose.msra.mxu0 0.0
    %170 = vmatprep.subr.mxu0 0.0
    %171 = vmatpush2.xpose.msra.mxu0 0.0
    %172 = vmatprep.subr.mxu0 0.0
    %173 = vmatpush2.xpose.msra.mxu0 0.0
    %174 = vmatprep.subr.mxu0 0.0
    %175 = vmatpush2.xpose.msra.mxu0 0.0
    %176 = vmatprep.subr.mxu0 0.0
    %177 = vmatpush2.xpose.msra.mxu0 0.0
    %178 = vmatprep.subr.mxu0 0.0
    %179 = vmatpush2.xpose.msra.mxu0 0.0
    %180 = vmatprep.subr.mxu0 0.0
    %181 = vmatpush2.xpose.msra.mxu0 0.0
    %182 = vmatprep.subr.mxu0 0.0
    %183 = vmatpush2.xpose.msra.mxu0 0.0
    %184 = vmatprep.subr.mxu0 0.0
    %185 = vmatpush2.xpose.msra.mxu0 0.0
    %186 = vmatprep.mubr.f32.mxu0 0.0
    %187 = vmatmul.mubr.f32.gmra.mxu0 %v117
    %v188 = vpop.f32.mrf.mxu0
    %v189 = vadd.f32 0.0, %v188
    %v190 = vpop.f32.mrf.mxu0
    %191 = vdwg.mxu0
    %193 = vset.pattern.permute.xlu0 0
    %194 = vperm.xlu0 %193, %v35
    %v195 = vpop.permute.xlu0 %194
    %v197 = vlaneseq
    %v198 = vshrl.u32 %v197, 7
    %v199 = vsub.s32 0, %v198
    %v200 = vrot.slane %v189, %v199
    %v201 = vadd.f32 %v195, %v200
    %v202 = vmul.f32 %v110, 2.0
    %v203 = vsub.f32 %v201, %v202
    %v204 = vmax.f32 %v203, 0.0
    %v205 = vrsqrt.pop %v204
    %v206 = vmul.f32 %v204, %v205
    %vm207 = vcmp.eq.f32.partialorder %v204, inf
    %v208 = vsel %vm207, %v204, %v206
    %vm209 = vcmp.eq.f32.partialorder %v204, 0.0
    %v210 = vand.u32 %v204, 2147483648
    %v211 = vsel %vm209, %v210, %v208
    %vm212 = vcmask 60416
    %v213 = vsel %vm212, %v211, inf
    %v214 = vrot.slane %v213, 4
    %v215 = vmin.f32 %v213, %v214
    %v216 = vrot.slane %v215, 2
    %v217 = vmin.f32 %v215, %v216
    %v218 = vrot.slane %v217, 1
    %v219 = vmin.f32 %v217, %v218
    %v220 = vsub.f32 %v211, %v219
    %v221 = vsub.f32 0.0, %v220
    %v222 = vmul.f32 %v221, 1.442695
    %v223 = vpow.pop %v222
    %v224 = vsel %vm212, %v223, 0.0
    %v225 = vrot.slane %v224, 4
    %v226 = vadd.f32 %v224, %v225
    %v227 = vrot.slane %v226, 2
    %v228 = vadd.f32 %v226, %v227
    %v229 = vrot.slane %v228, 1
    %v230 = vadd.f32 %v228, %v229
    %v231 = vrcp.pop %v230
    %v232 = vmul.f32 %v223, %v231
    %v233 = vsel %vm212, %v232, -inf
    %v234 = vrot.slane %v233, 4
    %v235 = vmax.f32 %v233, %v234
    %v236 = vrot.slane %v235, 2
    %v237 = vmax.f32 %v235, %v236
    %v238 = vrot.slane %v237, 1
    %v239 = vmax.f32 %v237, %v238
    %v240 = vmul.f32 %v232, %v220
    %v241 = vsel %vm212, %v240, 0.0
    %v242 = vrot.slane %v241, 4
    %v243 = vadd.f32 %v241, %v242
    %v244 = vrot.slane %v243, 2
    %v245 = vadd.f32 %v243, %v244
    %v246 = vrot.slane %v245, 1
    %v247 = vadd.f32 %v245, %v246
    %v248 = vlog2.pop %v230
    %v249 = vmul.f32 %v248, 0.6931472
    %v250 = vadd.f32 %v247, %v249
    %v251 = vlaneseq
    %v252 = vshrl.u32 %v251, 7
    %v253 = vsub.s32 1, %v252
    %v254 = vrot.slane %v189, %v253
    %v255 = vadd.f32 %v195, %v254
    %v256 = vsub.f32 %v255, %v202
    %v257 = vmax.f32 %v256, 0.0
    %v258 = vrsqrt.pop %v257
    %v259 = vmul.f32 %v257, %v258
    %vm260 = vcmp.eq.f32.partialorder %v257, inf
    %v261 = vsel %vm260, %v257, %v259
    %vm262 = vcmp.eq.f32.partialorder %v257, 0.0
    %v263 = vand.u32 %v257, 2147483648
    %v264 = vsel %vm262, %v263, %v261
    %vm265 = vcmask 64516
    %v266 = vsel %vm265, %v264, inf
    %v267 = vrot.slane %v266, 4
    %v268 = vmin.f32 %v266, %v267
    %v269 = vrot.slane %v268, 2
    %v270 = vmin.f32 %v268, %v269
    %v271 = vrot.slane %v270, 1
    %v272 = vmin.f32 %v270, %v271
    %v273 = vsub.f32 %v264, %v272
    %v274 = vsub.f32 0.0, %v273
    %v275 = vmul.f32 %v274, 1.442695
    %v276 = vpow.pop %v275
    %v278 = vrot.slane %v276, 4
    %v280 = vsel %vm212, %v278, 0.0
    %v281 = vrot.slane %v280, 4
    %v282 = vadd.f32 %v280, %v281
    %v283 = vrot.slane %v282, 2
    %v284 = vadd.f32 %v282, %v283
    %v285 = vrot.slane %v284, 1
    %v286 = vadd.f32 %v284, %v285
    %v287 = vrcp.pop %v286
    %v288 = vmul.f32 %v276, %v287
    %v289 = vsel %vm265, %v288, -inf
    %v290 = vrot.slane %v289, 4
    %v291 = vmax.f32 %v289, %v290
    %v292 = vrot.slane %v291, 2
    %v293 = vmax.f32 %v291, %v292
    %v294 = vrot.slane %v293, 1
    %v295 = vmax.f32 %v293, %v294
    %v296 = vmul.f32 %v288, %v273
    %v298 = vrot.slane %v296, 4
    %v300 = vsel %vm212, %v298, 0.0
    %v301 = vrot.slane %v300, 4
    %v302 = vadd.f32 %v300, %v301
    %v303 = vrot.slane %v302, 2
    %v304 = vadd.f32 %v302, %v303
    %v305 = vrot.slane %v304, 1
    %v306 = vadd.f32 %v304, %v305
    %v307 = vlog2.pop %v286
    %v308 = vmul.f32 %v307, 0.6931472
    %v309 = vadd.f32 %v306, %v308
    %vm310 = vcmask 1043456
    %v311 = vsel %vm310, %v232, %v288
    %vm312 = vcmask 64512
    %313 = vst.msk [vmem:[#allocation5] sm:$0xff] %vm312, %v311
    %vm314 = vcmask 1040384
    %v315 = vsel %vm314, %v239, %v250
    %vm316 = vcmask 1041408
    %v317 = vsel %vm316, %v315, %v295
    %vm318 = vcmask 1042432
    %v319 = vsel %vm318, %v317, %v309
    %320 = vst.msk [vmem:[#allocation6] sm:$0xf] %vm212, %v319
    // Predicated region
    $region18: #{tpu_custom_call.1} parent=1 // pred_check
      _
    $region19: #{tpu_custom_call.1} parent=1 // pred_check_branch
      %322 = sbr.rel (0) target = $region21
    $region20: #{tpu_custom_call.1} parent=1 // pred_region
      %s324 = ssub.s32 128, 128
      %325 = vsyncadd [#allocation4], %s324
      %s327 = sshll.u32 [#allocation5], 4
      %s328 = int_to_ptr.vmem [resolvable:$true] %s327
      %330 = dma.vmem_to_hbm [thread:$0]  %s328, 128, %s3, [#allocation4]
    $region21: #{tpu_custom_call.1} parent=1 // pred_fallthru
      _
    // Predicated region
    $region22: #{tpu_custom_call.1} parent=1 // pred_check
      _
    $region23: #{tpu_custom_call.1} parent=1 // pred_check_branch
      %332 = sbr.rel (0) target = $region25
    $region24: #{tpu_custom_call.1} parent=1 // pred_region
      %s334 = ssub.s32 64, 64
      %335 = vsyncadd [#allocation7], %s334
      %s337 = sshll.u32 [#allocation6], 4
      %s338 = int_to_ptr.vmem [resolvable:$true] %s337
      %340 = dma.vmem_to_hbm [thread:$0]  %s338, 64, %s4, [#allocation7]
    $region25: #{tpu_custom_call.1} parent=1 // pred_fallthru
      _
    // Predicated region
    $region26: #{tpu_custom_call.1} parent=1 // pred_check
      _
    $region27: #{tpu_custom_call.1} parent=1 // pred_check_branch
      %342 = sbr.rel (0) target = $region29
    $region28: #{tpu_custom_call.1} parent=1 // pred_region
      %343 = dma.done [#allocation4], 128
    $region29: #{tpu_custom_call.1} parent=1 // pred_fallthru
      _
    // Predicated region
    $region30: #{tpu_custom_call.1} parent=1 // pred_check
      _
    $region31: #{tpu_custom_call.1} parent=1 // pred_check_branch
      %345 = sbr.rel (0) target = $region33
    $region32: #{tpu_custom_call.1} parent=1 // pred_region
      %346 = dma.done [#allocation7], 64
    $region33: #{tpu_custom_call.1} parent=1 // pred_fallthru
      _
    %347 = vsyncpa [#allocation3], 1
    %348 = vsyncpa [#allocation4], 1
    %349 = vsyncpa [#allocation7], 1

</llo_original>
